<compile_context>
chip_gen: v7x
topology: tpu7x:2x2x1
jax: 0.10.0
libtpu: 0.0.40
codegen_flags: <defaults>
</compile_context>

<pallas_src>
import jax
import jax.numpy as jnp
from jax.experimental import pallas as pl
from jax.experimental.pallas import tpu as pltpu


def _bert_self_output_kernel(eps):
    def kernel(h_ref, wt_ref, b_ref, res_ref, g_ref, beta_ref, o_ref):
        # dense: h @ W_t   (W_t already [H_in, H_out] bf16, prepared in wrapper)
        h_bf = h_ref[...].astype(jnp.bfloat16)
        x = jax.lax.dot_general(
            h_bf, wt_ref[...],
            dimension_numbers=(((1,), (0,)), ((), ())),
            preferred_element_type=jnp.float32)
        x = x + b_ref[...]
        # TODO(synk): dropout omitted (inference / eval mode -> identity)
        # residual add in f32
        x = x + res_ref[...].astype(jnp.float32)
        # LayerNorm over the hidden (lane) axis, in f32
        mean = jnp.mean(x, axis=-1, keepdims=True)
        cent = x - mean
        var = jnp.mean(cent * cent, axis=-1, keepdims=True)
        y = cent * jax.lax.rsqrt(var + eps) * g_ref[...] + beta_ref[...]
        o_ref[...] = y.astype(o_ref.dtype)

    return kernel


def _round_up(x, m):
    return ((x + m - 1) // m) * m


def _vmem_costs(H, act_itemsize):
    # Fixed-resident operands: bf16 weight (single buffer) + bias/gamma/beta.
    fixed = H * H * 2 + 3 * H * 4 * 2
    # Per-row streaming cost: h + residual + output, each double-buffered,
    # plus ~3 live f32 intermediates inside the kernel body.
    per_row = 3 * 2 * H * act_itemsize + 3 * H * 4
    return fixed, per_row


def _choose_tile_m(M, H, act_itemsize, row_align, vmem_cap_bytes):
    fixed, per_row = _vmem_costs(H, act_itemsize)
    budget = max(vmem_cap_bytes - (24 << 20), 8 << 20)   # leave compiler headroom
    max_tile = max(row_align, (budget - fixed) // per_row)
    max_tile = max(row_align, min(2048, (max_tile // row_align) * row_align))

    m_aligned = _round_up(M, row_align)
    max_tile = min(max_tile, m_aligned)

    # Keep >= 2 grid steps when the row count allows it, so both v7x
    # TensorCores get work under dimension_semantics=("parallel",).
    if m_aligned >= 2 * row_align:
        max_tile = min(max_tile, _round_up(pl.cdiv(m_aligned, 2), row_align))
        max_tile = max(max_tile, row_align)

    # Prefer a tile that divides M exactly (no wrapper padding copies), as long
    # as it stays within 4x of the budget-derived tile size.
    if M % row_align == 0:
        t = max_tile
        while t >= row_align and t * 4 >= max_tile:
            if M % t == 0:
                return t, fixed, per_row
            t -= row_align
    return max_tile, fixed, per_row


def bert_self_output_forward(hidden_states, input_tensor, weight, bias, gamma,
                             beta, *, eps=1e-12, tile_m=None):
    """hidden_states, input_tensor: [B, S, H] (f32 or bf16).
    weight: [H_out, H_in] (PyTorch nn.Linear layout), bias/gamma/beta: [H]."""
    B, S, H = hidden_states.shape
    assert input_tensor.shape == (B, S, H)
    assert weight.shape == (H, H)
    M = B * S

    act_dtype = hidden_states.dtype
    act_itemsize = jnp.dtype(act_dtype).itemsize
    # bf16 activations pack 16 rows per sublane tile; f32 packs 8.
    row_align = 16 if act_itemsize < 4 else 8

    try:
        vmem_cap = int(pltpu.get_tpu_info().vmem_capacity_bytes)
    except Exception:
        vmem_cap = 64 << 20   # conservative fallback (v7x per-TC size)

    if tile_m is None:
        tile_m, fixed, per_row = _choose_tile_m(M, H, act_itemsize, row_align,
                                                vmem_cap)
    else:
        tile_m = max(row_align, (tile_m // row_align) * row_align)
        fixed, per_row = _vmem_costs(H, act_itemsize)

    M_pad = _round_up(M, tile_m)

    h2 = hidden_states.reshape(M, H)
    r2 = input_tensor.reshape(M, H)
    if M_pad != M:   # only hit for ragged row counts the divisor search missed
        pad = M_pad - M
        h2 = jnp.pad(h2, ((0, pad), (0, 0)))
        r2 = jnp.pad(r2, ((0, pad), (0, 0)))

    # One-time layout fix for the weight: [H_out, H_in] -> [H_in, H_out], bf16.
    wt = weight.T.astype(jnp.bfloat16)
    b2 = bias.reshape(1, H).astype(jnp.float32)
    g2 = gamma.reshape(1, H).astype(jnp.float32)
    be2 = beta.reshape(1, H).astype(jnp.float32)

    # Derived scoped-VMEM limit: resident operands + streamed tiles + slack.
    vmem_limit = int(fixed + tile_m * per_row + (8 << 20))
    vmem_limit = min(max(vmem_limit, 32 << 20), vmem_cap)

    def _invariant_spec(shape):
        # Single-buffer grid-invariant operands (DMA'd once, index never moves).
        try:
            return pl.BlockSpec(shape, lambda i: (0, 0),
                                pipeline_mode=pl.Buffered(1))
        except TypeError:
            return pl.BlockSpec(shape, lambda i: (0, 0))

    out = pl.pallas_call(
        _bert_self_output_kernel(float(eps)),
        out_shape=jax.ShapeDtypeStruct((M_pad, H), act_dtype),
        grid_spec=pltpu.PrefetchScalarGridSpec(
            num_scalar_prefetch=0,
            grid=(M_pad // tile_m,),
            in_specs=[
                pl.BlockSpec((tile_m, H), lambda i: (i, 0)),   # activations tile
                _invariant_spec((H, H)),                       # weight (bf16, resident)
                _invariant_spec((1, H)),                       # bias
                pl.BlockSpec((tile_m, H), lambda i: (i, 0)),   # residual tile
                _invariant_spec((1, H)),                       # LN gamma
                _invariant_spec((1, H)),                       # LN beta
            ],
            out_specs=pl.BlockSpec((tile_m, H), lambda i: (i, 0)),
        ),
        compiler_params=pltpu.CompilerParams(
            dimension_semantics=("parallel",),
            vmem_limit_bytes=vmem_limit),
    )(h2, wt, b2, r2, g2, be2)

    if M_pad != M:
        out = out[:M]
    return out.reshape(B, S, H)


def _reference(hidden_states, input_tensor, weight, bias, gamma, beta, eps):
    """f32 LayerNorm reference with bf16 matmul operands (matches kernel rounding)."""
    B, S, H = hidden_states.shape
    h2 = hidden_states.reshape(-1, H).astype(jnp.float32)
    r2 = input_tensor.reshape(-1, H).astype(jnp.float32)
    mm = jnp.dot(h2.astype(jnp.bfloat16), weight.T.astype(jnp.bfloat16),
                 preferred_element_type=jnp.float32) + bias
    x = mm + r2
    mu = x.mean(-1, keepdims=True)
    var = ((x - mu) ** 2).mean(-1, keepdims=True)
    y = (x - mu) / jnp.sqrt(var + eps) * gamma + beta
    return y.reshape(B, S, H)


if __name__ == "__main__":
    # config: hidden_size=32, layer_norm_eps=1e-12 (toy shapes)
    B, S, H = 2, 8, 32
    key = jax.random.PRNGKey(0)
    k1, k2, k3, k4, k5 = jax.random.split(key, 5)

    hidden_states = jax.random.normal(k1, (B, S, H), dtype=jnp.float32)
    input_tensor = jax.random.normal(k2, (B, S, H), dtype=jnp.float32)

    # deterministic synthetic parameters (not a checkpoint)
    weight = jax.random.normal(k3, (H, H), dtype=jnp.float32) * 0.02
    bias = jax.random.normal(k4, (H,), dtype=jnp.float32) * 0.02
    gamma = jnp.ones((H,), dtype=jnp.float32) + 0.1 * jax.random.normal(
        k5, (H,), dtype=jnp.float32)
    beta = jnp.zeros((H,), dtype=jnp.float32)

    # --- f32 I/O path (matches PyTorch f32 module, bf16 MXU operands) ---
    out = bert_self_output_forward(hidden_states, input_tensor, weight, bias,
                                   gamma, beta, eps=1e-12)
    jax.block_until_ready(out)

    ref = _reference(hidden_states, input_tensor, weight, bias, gamma, beta,
                     1e-12)
    assert jnp.allclose(out, ref, atol=2e-3, rtol=2e-3), "mismatch vs bf16 ref"

    # pure f32 reference, loose tolerance (bf16 matmul rounding)
    h2 = hidden_states.reshape(-1, H)
    r2 = input_tensor.reshape(-1, H)
    mm32 = h2 @ weight.T + bias
    x32 = mm32 + r2
    mu32 = x32.mean(-1, keepdims=True)
    var32 = ((x32 - mu32) ** 2).mean(-1, keepdims=True)
    ref32 = ((x32 - mu32) / jnp.sqrt(var32 + 1e-12) * gamma + beta).reshape(B, S, H)
    assert jnp.allclose(out, ref32, atol=5e-2, rtol=5e-2), "mismatch vs f32 ref"

    # --- ragged row count (exercises the padding fallback path) ---
    hs_r = hidden_states[:1, :5]
    it_r = input_tensor[:1, :5]
    out_r = bert_self_output_forward(hs_r, it_r, weight, bias, gamma, beta,
                                     eps=1e-12)
    jax.block_until_ready(out_r)
    ref_r = _reference(hs_r, it_r, weight, bias, gamma, beta, 1e-12)
    assert jnp.allclose(out_r, ref_r, atol=2e-3, rtol=2e-3), "ragged mismatch"

    # --- bf16 I/O smoke test (halved HBM traffic path) ---
    hs_bf = hidden_states.astype(jnp.bfloat16)
    it_bf = input_tensor.astype(jnp.bfloat16)
    out_bf = bert_self_output_forward(hs_bf, it_bf, weight, bias, gamma, beta,
                                      eps=1e-12)
    jax.block_until_ready(out_bf)
    assert out_bf.dtype == jnp.bfloat16
    ref_bf = _reference(hs_bf, it_bf, weight, bias, gamma, beta, 1e-12)
    assert jnp.allclose(out_bf.astype(jnp.float32), ref_bf,
                        atol=1e-1, rtol=1e-1), "bf16 I/O mismatch"

    print("KERNEL_OK")
</pallas_src>

<mosaic_0001>
module attributes {stable_mosaic.version = 11 : i64} {
  func.func @kernel(%arg0: i32, %arg1: memref<8x32xf32, #tpu.memory_space<vmem>>, %arg2: memref<32x32xbf16, #tpu.memory_space<vmem>>, %arg3: memref<1x32xf32, #tpu.memory_space<vmem>>, %arg4: memref<8x32xf32, #tpu.memory_space<vmem>>, %arg5: memref<1x32xf32, #tpu.memory_space<vmem>>, %arg6: memref<1x32xf32, #tpu.memory_space<vmem>>, %arg7: memref<8x32xf32, #tpu.memory_space<vmem>>) attributes {dimension_semantics = [#tpu.dimension_semantics<parallel>], iteration_bounds = array<i64: 2>, scalar_prefetch = 0 : i64, scratch_operands = 0 : i64, tpu.core_type = #tpu.core_type<tc>, window_params = [{transform_indices = @transform_0, window_bounds = array<i64: 8, 32>}, {pipeline_mode = #tpu.pipeline_mode<synchronous>, transform_indices = @transform_1, window_bounds = array<i64: 32, 32>}, {pipeline_mode = #tpu.pipeline_mode<synchronous>, transform_indices = @transform_2, window_bounds = array<i64: 1, 32>}, {transform_indices = @transform_3, window_bounds = array<i64: 8, 32>}, {pipeline_mode = #tpu.pipeline_mode<synchronous>, transform_indices = @transform_4, window_bounds = array<i64: 1, 32>}, {pipeline_mode = #tpu.pipeline_mode<synchronous>, transform_indices = @transform_5, window_bounds = array<i64: 1, 32>}, {transform_indices = @transform_6, window_bounds = array<i64: 8, 32>}]} {
    %c0 = arith.constant 0 : index
    %c0_0 = arith.constant 0 : index
    %0 = vector.load %arg1[%c0, %c0_0] : memref<8x32xf32, #tpu.memory_space<vmem>>, vector<8x32xf32>
    %1 = arith.truncf %0 : vector<8x32xf32> to vector<8x32xbf16>
    %c0_1 = arith.constant 0 : index
    %c0_2 = arith.constant 0 : index
    %2 = vector.load %arg2[%c0_1, %c0_2] : memref<32x32xbf16, #tpu.memory_space<vmem>>, vector<32x32xbf16>
    %cst = arith.constant dense<0.000000e+00> : vector<8x32xf32>
    %3 = tpu.matmul %1, %2, %cst {dimension_numbers = #tpu.dot_dimension_numbers<[1], [0], [0], [1], [0, 0, 1, 1], [], []>} : vector<8x32xbf16>, vector<32x32xbf16>, vector<8x32xf32> -> vector<8x32xf32>
    %c0_3 = arith.constant 0 : index
    %c0_4 = arith.constant 0 : index
    %4 = vector.load %arg3[%c0_3, %c0_4] : memref<1x32xf32, #tpu.memory_space<vmem>>, vector<1x32xf32>
    %5 = vector.broadcast %4 : vector<1x32xf32> to vector<8x32xf32>
    %6 = arith.addf %3, %5 : vector<8x32xf32>
    %c0_5 = arith.constant 0 : index
    %c0_6 = arith.constant 0 : index
    %7 = vector.load %arg4[%c0_5, %c0_6] : memref<8x32xf32, #tpu.memory_space<vmem>>, vector<8x32xf32>
    %8 = arith.addf %6, %7 : vector<8x32xf32>
    %cst_7 = arith.constant dense<0.000000e+00> : vector<8xf32>
    %9 = vector.multi_reduction <add>, %8, %cst_7 [1] : vector<8x32xf32> to vector<8xf32>
    %10 = vector.shape_cast %9 : vector<8xf32> to vector<8x1xf32>
    %cst_8 = arith.constant 3.200000e+01 : f32
    %11 = vector.broadcast %cst_8 : f32 to vector<8x1xf32>
    %12 = arith.divf %10, %11 : vector<8x1xf32>
    %13 = vector.broadcast %12 : vector<8x1xf32> to vector<8x32xf32>
    %14 = arith.subf %8, %13 : vector<8x32xf32>
    %15 = arith.mulf %14, %14 : vector<8x32xf32>
    %cst_9 = arith.constant dense<0.000000e+00> : vector<8xf32>
    %16 = vector.multi_reduction <add>, %15, %cst_9 [1] : vector<8x32xf32> to vector<8xf32>
    %17 = vector.shape_cast %16 : vector<8xf32> to vector<8x1xf32>
    %cst_10 = arith.constant 3.200000e+01 : f32
    %18 = vector.broadcast %cst_10 : f32 to vector<8x1xf32>
    %19 = arith.divf %17, %18 : vector<8x1xf32>
    %cst_11 = arith.constant 9.99999996E-13 : f32
    %20 = vector.broadcast %cst_11 : f32 to vector<8x1xf32>
    %21 = arith.addf %19, %20 : vector<8x1xf32>
    %22 = math.rsqrt %21 : vector<8x1xf32>
    %23 = vector.broadcast %22 : vector<8x1xf32> to vector<8x32xf32>
    %24 = arith.mulf %14, %23 : vector<8x32xf32>
    %c0_12 = arith.constant 0 : index
    %c0_13 = arith.constant 0 : index
    %25 = vector.load %arg5[%c0_12, %c0_13] : memref<1x32xf32, #tpu.memory_space<vmem>>, vector<1x32xf32>
    %26 = vector.broadcast %25 : vector<1x32xf32> to vector<8x32xf32>
    %27 = arith.mulf %24, %26 : vector<8x32xf32>
    %c0_14 = arith.constant 0 : index
    %c0_15 = arith.constant 0 : index
    %28 = vector.load %arg6[%c0_14, %c0_15] : memref<1x32xf32, #tpu.memory_space<vmem>>, vector<1x32xf32>
    %29 = vector.broadcast %28 : vector<1x32xf32> to vector<8x32xf32>
    %30 = arith.addf %27, %29 : vector<8x32xf32>
    %c0_16 = arith.constant 0 : index
    %c0_17 = arith.constant 0 : index
    %31 = vector.load %arg7[%c0_16, %c0_17] : memref<8x32xf32, #tpu.memory_space<vmem>>, vector<8x32xf32>
    tpu.vector_store %arg7[%c0_16, %c0_17], %30 {strides = array<i32>} : memref<8x32xf32, #tpu.memory_space<vmem>>, vector<8x32xf32>,
    return
  }
  func.func @transform_0(%arg0: i32) -> (i32, i32) {
    %c0_i32 = arith.constant 0 : i32
    %c0_i32_0 = arith.constant 0 : i32
    return %arg0, %c0_i32 : i32, i32
  }
  func.func @transform_1(%arg0: i32) -> (i32, i32) {
    %c0_i32 = arith.constant 0 : i32
    %c0_i32_0 = arith.constant 0 : i32
    %c0_i32_1 = arith.constant 0 : i32
    return %c0_i32, %c0_i32_0 : i32, i32
  }
  func.func @transform_2(%arg0: i32) -> (i32, i32) {
    %c0_i32 = arith.constant 0 : i32
    %c0_i32_0 = arith.constant 0 : i32
    %c0_i32_1 = arith.constant 0 : i32
    return %c0_i32, %c0_i32_0 : i32, i32
  }
  func.func @transform_3(%arg0: i32) -> (i32, i32) {
    %c0_i32 = arith.constant 0 : i32
    %c0_i32_0 = arith.constant 0 : i32
    return %arg0, %c0_i32 : i32, i32
  }
  func.func @transform_4(%arg0: i32) -> (i32, i32) {
    %c0_i32 = arith.constant 0 : i32
    %c0_i32_0 = arith.constant 0 : i32
    %c0_i32_1 = arith.constant 0 : i32
    return %c0_i32, %c0_i32_0 : i32, i32
  }
  func.func @transform_5(%arg0: i32) -> (i32, i32) {
    %c0_i32 = arith.constant 0 : i32
    %c0_i32_0 = arith.constant 0 : i32
    %c0_i32_1 = arith.constant 0 : i32
    return %c0_i32, %c0_i32_0 : i32, i32
  }
  func.func @transform_6(%arg0: i32) -> (i32, i32) {
    %c0_i32 = arith.constant 0 : i32
    %c0_i32_0 = arith.constant 0 : i32
    return %arg0, %c0_i32 : i32, i32
  }
}

</mosaic_0001>

<llo_original>
// kernel: tpu_custom_call.1
$region0: #{tpu_custom_call.1}
  #allocation0 [shape = 'u32[]', space=smem, size = 0x4, offset = 0x4, fixed_abs, tag = 'smem constant byte address 0x4 - core index']
  #allocation1 [shape = 'u32[144,128]{1,0:T(1,128)}', space=vmem, size = 0x12000, scoped, tag = 'internal scratch']
  %s0 = inlined_call_operand.hbm [shape: f32[16,32], index: 0, kind: input, shape index: {}]
  %s1 = inlined_call_operand.hbm [shape: bf16[32,32], index: 1, kind: input, shape index: {}]
  %s2 = inlined_call_operand.vmem [shape: f32[1,32], index: 2, kind: input, shape index: {}]
  %s3 = inlined_call_operand.hbm [shape: f32[16,32], index: 3, kind: input, shape index: {}]
  %s4 = inlined_call_operand.vmem [shape: f32[1,32], index: 4, kind: input, shape index: {}]
  %s5 = inlined_call_operand.vmem [shape: f32[1,32], index: 5, kind: input, shape index: {}]
  %s6 = inlined_call_operand.hbm [shape: f32[16,32], index: 6, kind: output, shape index: {}]
  %s7 = sld [smem:[#allocation0]]
  $region69: #{tpu_custom_call.1} parent=0
    _
  %s9 = ssub.s32 1, %s7
  %s10 = scalar_select 0, %s9, %s7
  $region1: #{tpu_custom_call.1} parent=0
    #allocation2 [shape = 'u8[8192]{0}', space=vmem, size = 0x2000, scoped, tag = 'input window, operand 0']
    #allocation3 [shape = 's32[2]{0}', space=sflag, size = 0x8, scoped, tag = 'scoped memory for tpu_custom_call.1']
    #allocation4 [shape = 's32[2]{0}', space=sflag, size = 0x8, scoped, tag = 'scoped memory for tpu_custom_call.1']
    #allocation5 [shape = 'u8[8192]{0}', space=vmem, size = 0x2000, scoped, tag = 'input window, operand 1, single buffered']
    #allocation6 [shape = 's32[1]{0}', space=sflag, size = 0x4, scoped, tag = 'scoped memory for tpu_custom_call.1']
    #allocation7 [shape = 'u8[8192]{0}', space=vmem, size = 0x2000, scoped, tag = 'input window, operand 3']
    #allocation8 [shape = 'u8[8192]{0}', space=vmem, size = 0x2000, scoped, tag = 'output window, operand 0']
    %11 = vsyncpa [#allocation3], 0
    %s12 = scalar_lea.sflag [#allocation3], 1
    %13 = vsyncpa %s12, 0
    %14 = vsyncpa [#allocation6], 0
    %15 = vsyncpa [#allocation4], 0
    %s16 = scalar_lea.sflag [#allocation4], 1
    %17 = vsyncpa %s16, 0
    loop: start=0, step=1, limit=4
    $region2: #{tpu_custom_call.1} parent=1 // loop_pre_header
      _
    $region3: #{tpu_custom_call.1} parent=1 // loop_header
      %s19 = sphi 0, %s23
      %p20 = scmp.ge.s32.totalorder %s19, 4
      %s29 = sphi 0, %s31
      %s32 = sphi 0, %s29
      %s33 = sphi 0, %s32
      %s49 = sphi 0, %s33
      %s53 = sphi 0, %s53
      %s55 = sphi 0, %s53
      %s56 = sphi 0, %s55
      %s70 = sphi 0, %s56
      %s74 = sphi 0, %s74
      %s76 = sphi 0, %s74
      %s77 = sphi 0, %s76
      %s91 = sphi 0, %s77
      %s97 = sphi 0, %s99
      %s100 = sphi 0, %s97
      %s101 = sphi 0, %s100
      %s117 = sphi 0, %s101
      %s121 = sphi 0, %s121
      %s123 = sphi 0, %s121
      %s124 = sphi 0, %s123
      %s138 = sphi 0, %s124
      %s142 = sphi 0, %s142
      %s144 = sphi 0, %s142
      %s145 = sphi 0, %s144
      %s159 = sphi 0, %s145
      %s165 = sphi 0, %s167
      %s168 = sphi 0, %s165
      %s169 = sphi 0, %s168
      %s185 = sphi 0, %s169
    $region4: #{tpu_custom_call.1} parent=1 // loop_header_branch
      %22 = sbr.rel (%p20) target = $region8
    $region5: #{tpu_custom_call.1} parent=1 // loop_body
      %s24 = ssub.s32 %s19, 1
      %s25 = ssub.s32 %s19, 2
      %s26 = sadd.s32 %s19, 1
      %s27 = ssub.s32 %s19, %s26
      %p28 = scmp.eq.s32.totalorder %s27, 0
      %s30 = sadd.s32 %s29, 1
      %s31 = scalar_select %p28, %s29, %s30
      %p34 = pneg %p28
      %p35 = scmp.eq.s32.totalorder %s19, 1
      %p36 = por %p34, %p35
      %p37 = scmp.ne.s32.totalorder %s29, %s32
      %p38 = scmp.eq.s32.totalorder %s19, 0
      %p39 = por %p37, %p38
      %p40 = scmp.ne.s32.totalorder %s29, %s32
      %p41 = scmp.eq.s32.totalorder %s24, 1
      %p42 = por %p40, %p41
      %p43 = scmp.ne.s32.totalorder %s32, %s33
      %p44 = scmp.eq.s32.totalorder %s24, 0
      %p45 = por %p43, %p44
      %p46 = scmp.ne.s32.totalorder %s32, %s33
      %p47 = scmp.eq.s32.totalorder %s25, 1
      %p48 = por %p46, %p47
      %p50 = scmp.ne.s32.totalorder %s33, %s49
      %p51 = scmp.eq.s32.totalorder %s25, 0
      %p52 = por %p50, %p51
      %s54 = sadd.s32 %s53, 1
      %p57 = scmp.eq.s32.totalorder %s19, 1
      %p58 = scmp.ne.s32.totalorder %s53, %s55
      %p59 = scmp.eq.s32.totalorder %s19, 0
      %p60 = por %p58, %p59
      %p61 = scmp.ne.s32.totalorder %s53, %s55
      %p62 = scmp.eq.s32.totalorder %s24, 1
      %p63 = por %p61, %p62
      %p64 = scmp.ne.s32.totalorder %s55, %s56
      %p65 = scmp.eq.s32.totalorder %s24, 0
      %p66 = por %p64, %p65
      %p67 = scmp.ne.s32.totalorder %s55, %s56
      %p68 = scmp.eq.s32.totalorder %s25, 1
      %p69 = por %p67, %p68
      %p71 = scmp.ne.s32.totalorder %s56, %s70
      %p72 = scmp.eq.s32.totalorder %s25, 0
      %p73 = por %p71, %p72
      %s75 = sadd.s32 %s74, 1
      %p78 = scmp.eq.s32.totalorder %s19, 1
      %p79 = scmp.ne.s32.totalorder %s74, %s76
      %p80 = scmp.eq.s32.totalorder %s19, 0
      %p81 = por %p79, %p80
      %p82 = scmp.ne.s32.totalorder %s74, %s76
      %p83 = scmp.eq.s32.totalorder %s24, 1
      %p84 = por %p82, %p83
      %p85 = scmp.ne.s32.totalorder %s76, %s77
      %p86 = scmp.eq.s32.totalorder %s24, 0
      %p87 = por %p85, %p86
      %p88 = scmp.ne.s32.totalorder %s76, %s77
      %p89 = scmp.eq.s32.totalorder %s25, 1
      %p90 = por %p88, %p89
      %p92 = scmp.ne.s32.totalorder %s77, %s91
      %p93 = scmp.eq.s32.totalorder %s25, 0
      %p94 = por %p92, %p93
      %s95 = ssub.s32 %s19, %s26
      %p96 = scmp.eq.s32.totalorder %s95, 0
      %s98 = sadd.s32 %s97, 1
      %s99 = scalar_select %p96, %s97, %s98
      %p102 = pneg %p96
      %p103 = scmp.eq.s32.totalorder %s19, 1
      %p104 = por %p102, %p103
      %p105 = scmp.ne.s32.totalorder %s97, %s100
      %p106 = scmp.eq.s32.totalorder %s19, 0
      %p107 = por %p105, %p106
      %p108 = scmp.ne.s32.totalorder %s97, %s100
      %p109 = scmp.eq.s32.totalorder %s24, 1
      %p110 = por %p108, %p109
      %p111 = scmp.ne.s32.totalorder %s100, %s101
      %p112 = scmp.eq.s32.totalorder %s24, 0
      %p113 = por %p111, %p112
      %p114 = scmp.ne.s32.totalorder %s100, %s101
      %p115 = scmp.eq.s32.totalorder %s25, 1
      %p116 = por %p114, %p115
      %p118 = scmp.ne.s32.totalorder %s101, %s117
      %p119 = scmp.eq.s32.totalorder %s25, 0
      %p120 = por %p118, %p119
      %s122 = sadd.s32 %s121, 1
      %p125 = scmp.eq.s32.totalorder %s19, 1
      %p126 = scmp.ne.s32.totalorder %s121, %s123
      %p127 = scmp.eq.s32.totalorder %s19, 0
      %p128 = por %p126, %p127
      %p129 = scmp.ne.s32.totalorder %s121, %s123
      %p130 = scmp.eq.s32.totalorder %s24, 1
      %p131 = por %p129, %p130
      %p132 = scmp.ne.s32.totalorder %s123, %s124
      %p133 = scmp.eq.s32.totalorder %s24, 0
      %p134 = por %p132, %p133
      %p135 = scmp.ne.s32.totalorder %s123, %s124
      %p136 = scmp.eq.s32.totalorder %s25, 1
      %p137 = por %p135, %p136
      %p139 = scmp.ne.s32.totalorder %s124, %s138
      %p140 = scmp.eq.s32.totalorder %s25, 0
      %p141 = por %p139, %p140
      %s143 = sadd.s32 %s142, 1
      %p146 = scmp.eq.s32.totalorder %s19, 1
      %p147 = scmp.ne.s32.totalorder %s142, %s144
      %p148 = scmp.eq.s32.totalorder %s19, 0
      %p149 = por %p147, %p148
      %p150 = scmp.ne.s32.totalorder %s142, %s144
      %p151 = scmp.eq.s32.totalorder %s24, 1
      %p152 = por %p150, %p151
      %p153 = scmp.ne.s32.totalorder %s144, %s145
      %p154 = scmp.eq.s32.totalorder %s24, 0
      %p155 = por %p153, %p154
      %p156 = scmp.ne.s32.totalorder %s144, %s145
      %p157 = scmp.eq.s32.totalorder %s25, 1
      %p158 = por %p156, %p157
      %p160 = scmp.ne.s32.totalorder %s145, %s159
      %p161 = scmp.eq.s32.totalorder %s25, 0
      %p162 = por %p160, %p161
      %s163 = ssub.s32 %s19, %s26
      %p164 = scmp.eq.s32.totalorder %s163, 0
      %s166 = sadd.s32 %s165, 1
      %s167 = scalar_select %p164, %s165, %s166
      %p170 = pneg %p164
      %p171 = scmp.eq.s32.totalorder %s19, 1
      %p172 = por %p170, %p171
      %p173 = scmp.ne.s32.totalorder %s165, %s168
      %p174 = scmp.eq.s32.totalorder %s19, 0
      %p175 = por %p173, %p174
      %p176 = scmp.ne.s32.totalorder %s165, %s168
      %p177 = scmp.eq.s32.totalorder %s24, 1
      %p178 = por %p176, %p177
      %p179 = scmp.ne.s32.totalorder %s168, %s169
      %p180 = scmp.eq.s32.totalorder %s24, 0
      %p181 = por %p179, %p180
      %p182 = scmp.ne.s32.totalorder %s168, %s169
      %p183 = scmp.eq.s32.totalorder %s25, 1
      %p184 = por %p182, %p183
      %p186 = scmp.ne.s32.totalorder %s169, %s185
      %p187 = scmp.eq.s32.totalorder %s25, 0
      %p188 = por %p186, %p187
      %p189 = scmp.le.s32.totalorder 1, %s19
      %p190 = scmp.lt.s32.totalorder %s19, 3
      %p191 = pnand %p189, %p190
      %p192 = pneg %p191
      // Predicated region
      $region9: #{tpu_custom_call.1} parent=5 // pred_check
        _
      $region10: #{tpu_custom_call.1} parent=5 // pred_check_branch
        %194 = sbr.rel (%p191) target = $region12
      $region11: #{tpu_custom_call.1} parent=5 // pred_region
        %s195 = ssub.s32 %s19, 1
        // Predicated region
        $region13: #{tpu_custom_call.1} parent=11 // pred_check
          %p196 = pneg %p66
        $region14: #{tpu_custom_call.1} parent=11 // pred_check_branch
          %198 = sbr.rel (%p196) target = $region16
        $region15: #{tpu_custom_call.1} parent=11 // pred_region
          %s200 = ssub.s32 256, 256
          %201 = vsyncadd [#allocation6], %s200
          %s202 = sshll.u32 [#allocation5], 4
          %s203 = int_to_ptr.vmem [resolvable:$true] %s202
          %208 = dma.hbm_to_vmem [thread:$0]  %s1, 256, %s203, [#allocation6], 64, 64, 4
        $region16: #{tpu_custom_call.1} parent=11 // pred_fallthru
          _
        // Predicated region
        $region17: #{tpu_custom_call.1} parent=11 // pred_check
          %p209 = pneg %p87
        $region18: #{tpu_custom_call.1} parent=11 // pred_check_branch
          %211 = sbr.rel (%p209) target = $region20
        $region19: #{tpu_custom_call.1} parent=11 // pred_region
          _
        $region20: #{tpu_custom_call.1} parent=11 // pred_fallthru
          _
        // Predicated region
        $region21: #{tpu_custom_call.1} parent=11 // pred_check
          %p212 = pneg %p134
        $region22: #{tpu_custom_call.1} parent=11 // pred_check_branch
          %214 = sbr.rel (%p212) target = $region24
        $region23: #{tpu_custom_call.1} parent=11 // pred_region
          _
        $region24: #{tpu_custom_call.1} parent=11 // pred_fallthru
          _
        // Predicated region
        $region25: #{tpu_custom_call.1} parent=11 // pred_check
          %p215 = pneg %p155
        $region26: #{tpu_custom_call.1} parent=11 // pred_check_branch
          %217 = sbr.rel (%p215) target = $region28
        $region27: #{tpu_custom_call.1} parent=11 // pred_region
          _
        $region28: #{tpu_custom_call.1} parent=11 // pred_fallthru
          _
      $region12: #{tpu_custom_call.1} parent=5 // pred_fallthru
        _
      %p218 = scmp.lt.s32.totalorder %s19, 2
      // Predicated region
      $region29: #{tpu_custom_call.1} parent=5 // pred_check
        %p219 = pneg %p218
      $region30: #{tpu_custom_call.1} parent=5 // pred_check_branch
        %221 = sbr.rel (%p219) target = $region32
      $region31: #{tpu_custom_call.1} parent=5 // pred_region
        // Predicated region
        $region33: #{tpu_custom_call.1} parent=31 // pred_check
          %p222 = pneg %p39
        $region34: #{tpu_custom_call.1} parent=31 // pred_check_branch
          %224 = sbr.rel (%p222) target = $region36
        $region35: #{tpu_custom_call.1} parent=31 // pred_region
          %s225 = sand.u32 %s19, 1
          %s226 = scalar_lea.sflag [#allocation3], %s225
          %s227 = sand.u32 %s29, 1
          %s228 = smul.addr %s227, 8
          %s229 = scalar_lea.vmem [#allocation2], %s228
          %s231 = ssub.s32 128, 128
          %232 = vsyncadd %s226, %s231
          %s233 = smul.addr %s19, 128
          %s234 = scalar_lea.hbm %s0, %s233
          %s236 = sshll.u32 %s229, 4
          %s237 = int_to_ptr.vmem [resolvable:$true] %s236
          %239 = dma.hbm_to_vmem [thread:$0]  %s234, 128, %s237, %s226
        $region36: #{tpu_custom_call.1} parent=31 // pred_fallthru
          _
        // Predicated region
        $region37: #{tpu_custom_call.1} parent=31 // pred_check
          %p240 = pneg %p107
        $region38: #{tpu_custom_call.1} parent=31 // pred_check_branch
          %242 = sbr.rel (%p240) target = $region40
        $region39: #{tpu_custom_call.1} parent=31 // pred_region
          %s243 = sand.u32 %s19, 1
          %s244 = scalar_lea.sflag [#allocation3], %s243
          %s245 = sand.u32 %s97, 1
          %s246 = smul.addr %s245, 8
          %s247 = scalar_lea.vmem [#allocation7], %s246
          %s249 = ssub.s32 128, 128
          %250 = vsyncadd %s244, %s249
          %s251 = smul.addr %s19, 128
          %s252 = scalar_lea.hbm %s3, %s251
          %s254 = sshll.u32 %s247, 4
          %s255 = int_to_ptr.vmem [resolvable:$true] %s254
          %257 = dma.hbm_to_vmem [thread:$0]  %s252, 128, %s255, %s244
        $region40: #{tpu_custom_call.1} parent=31 // pred_fallthru
          _
      $region32: #{tpu_custom_call.1} parent=5 // pred_fallthru
        _
      %p258 = scmp.le.s32.totalorder 1, %s19
      %p259 = scmp.lt.s32.totalorder %s19, 3
      %p260 = pnand %p258, %p259
      %p261 = pneg %p260
      // Predicated region
      $region41: #{tpu_custom_call.1} parent=5 // pred_check
        _
      $region42: #{tpu_custom_call.1} parent=5 // pred_check_branch
        %263 = sbr.rel (%p260) target = $region44
      $region43: #{tpu_custom_call.1} parent=5 // pred_region
        %s264 = ssub.s32 %s19, 1
        %s265 = sand.u32 %s24, 1
        %s266 = scalar_lea.sflag [#allocation3], %s265
        %s267 = sand.u32 %s32, 1
        %s268 = smul.addr %s267, 8
        %s269 = scalar_lea.vmem [#allocation2], %s268
        // Predicated region
        $region45: #{tpu_custom_call.1} parent=43 // pred_check
          %p270 = pneg %p45
        $region46: #{tpu_custom_call.1} parent=43 // pred_check_branch
          %272 = sbr.rel (%p270) target = $region48
        $region47: #{tpu_custom_call.1} parent=43 // pred_region
          %273 = dma.done %s266, 128
        $region48: #{tpu_custom_call.1} parent=43 // pred_fallthru
          _
        // Predicated region
        $region49: #{tpu_custom_call.1} parent=43 // pred_check
          %p274 = pneg %p66
        $region50: #{tpu_custom_call.1} parent=43 // pred_check_branch
          %276 = sbr.rel (%p274) target = $region52
        $region51: #{tpu_custom_call.1} parent=43 // pred_region
          %277 = dma.done [#allocation6], 256
        $region52: #{tpu_custom_call.1} parent=43 // pred_fallthru
          _
        %s278 = sand.u32 %s24, 1
        %s279 = scalar_lea.sflag [#allocation3], %s278
        %s280 = sand.u32 %s100, 1
        %s281 = smul.addr %s280, 8
        %s282 = scalar_lea.vmem [#allocation7], %s281
        // Predicated region
        $region53: #{tpu_custom_call.1} parent=43 // pred_check
          %p283 = pneg %p113
        $region54: #{tpu_custom_call.1} parent=43 // pred_check_branch
          %285 = sbr.rel (%p283) target = $region56
        $region55: #{tpu_custom_call.1} parent=43 // pred_region
          %286 = dma.done %s279, 128
        $region56: #{tpu_custom_call.1} parent=43 // pred_fallthru
          _
        %s287 = sand.u32 %s24, 1
        %s288 = scalar_lea.sflag [#allocation3], %s287
        %s289 = sand.u32 %s32, 1
        %s290 = smul.addr %s289, 8
        %s291 = scalar_lea.vmem [#allocation2], %s290
        %p292 = pneg %p45
        %p293 = pneg %p42
        %p294 = pneg %p66
        %p295 = pneg %p63
        %p296 = pneg %p87
        %p297 = pneg %p84
        %s298 = sand.u32 %s24, 1
        %s299 = scalar_lea.sflag [#allocation3], %s298
        %s300 = sand.u32 %s100, 1
        %s301 = smul.addr %s300, 8
        %s302 = scalar_lea.vmem [#allocation7], %s301
        %p303 = pneg %p113
        %p304 = pneg %p110
        %p305 = pneg %p134
        %p306 = pneg %p131
        %p307 = pneg %p155
        %p308 = pneg %p152
        %p309 = pneg %p181
        %p310 = pneg %p178
        %s311 = sand.u32 %s168, 1
        %s312 = scalar_lea.sflag [#allocation4], %s311
        %s313 = sand.u32 %s168, 1
        %s314 = smul.addr %s313, 8
        %s315 = scalar_lea.vmem [#allocation8], %s314
        %v317 = vld [vmem:[%s269] sm:$0xff]
        %v318 = vpack.c.bf16 %v317, %v317
        %v319 = vld [vmem:[#allocation5] sm:$0xf]
        %v320 = vld [vmem:[#allocation5 + $0x4] sm:$0xf]
        %v321 = vld [vmem:[#allocation5 + $0x8] sm:$0xf]
        %v322 = vld [vmem:[#allocation5 + $0xc] sm:$0xf]
        %v323 = vld [vmem:[%s2] sm:$0x1]
        %v325 = vlaneseq
        %v326 = vshrl.u32 %v325, 7
        %v327 = vsub.s32 0, %v326
        %v328 = vrot.slane %v323, %v327
        %v334 = vunpack.c.l.b16 %v319
        %v335 = vunpack.c.l.b16 %v320
        %v336 = vunpack.c.l.b16 %v321
        %v337 = vunpack.c.l.b16 %v322
        %v338 = vpack.c.b16 %v335, %v334
        %v339 = vpack.c.b16 %v337, %v336
        %vm342 = vcmask 261120
        %v344 = vsel %vm342, %v318, 0
        %346 = vmatprep.subr.bf16.mxu0 0
        %347 = vmatpush1.bf16.msra.mxu0 %v338
        %348 = vmatprep.subr.bf16.mxu0 0
        %349 = vmatpush1.bf16.msra.mxu0 %v339
        %350 = vmatprep.subr.bf16.mxu0 0
        %351 = vmatpush1.bf16.msra.mxu0 0
        %352 = vmatprep.subr.bf16.mxu0 0
        %353 = vmatpush1.bf16.msra.mxu0 0
        %354 = vmatprep.subr.bf16.mxu0 0
        %355 = vmatpush1.bf16.msra.mxu0 0
        %356 = vmatprep.subr.bf16.mxu0 0
        %357 = vmatpush1.bf16.msra.mxu0 0
        %358 = vmatprep.subr.bf16.mxu0 0
        %359 = vmatpush1.bf16.msra.mxu0 0
        %360 = vmatprep.subr.bf16.mxu0 0
        %361 = vmatpush1.bf16.msra.mxu0 0
        %362 = vmatprep.subr.bf16.mxu0 0
        %363 = vmatpush1.bf16.msra.mxu0 0
        %364 = vmatprep.subr.bf16.mxu0 0
        %365 = vmatpush1.bf16.msra.mxu0 0
        %366 = vmatprep.subr.bf16.mxu0 0
        %367 = vmatpush1.bf16.msra.mxu0 0
        %368 = vmatprep.subr.bf16.mxu0 0
        %369 = vmatpush1.bf16.msra.mxu0 0
        %370 = vmatprep.subr.bf16.mxu0 0
        %371 = vmatpush1.bf16.msra.mxu0 0
        %372 = vmatprep.subr.bf16.mxu0 0
        %373 = vmatpush1.bf16.msra.mxu0 0
        %374 = vmatprep.subr.bf16.mxu0 0
        %375 = vmatpush1.bf16.msra.mxu0 0
        %376 = vmatprep.subr.bf16.mxu0 0
        %377 = vmatpush1.bf16.msra.mxu0 0
        %378 = vmatprep.mubr.bf16.mxu0 0
        %379 = vmatmul.mubr.bf16.gmra.mrb[0].mxu0 %v344
        %v380 = vpop.f32.mrb[0].mxu0
        %v381 = vadd.f32 %v328, %v380
        %v382 = vpop.f32.mrb[0].mxu0
        %v383 = vpop.f32.mrb[0].mxu0
        %v384 = vpop.f32.mrb[0].mxu0
        %385 = vdwg.mxu0
        %v386 = vld [vmem:[%s282] sm:$0xff]
        %v387 = vadd.f32 %v381, %v386
        %v388 = vsel %vm342, %v387, 0.0
        %389 = vadd.xlane.f32.xlu0 %v388
        %v390 = vpop.xlane.xlu0 %389
        %v391 = vrcp.pop 32.0
        %v392 = vmul.f32 %v390, %v391
        %v393 = vsub.f32 %v387, %v392
        %v394 = vmul.f32 %v393, %v393
        %v395 = vsel %vm342, %v394, 0.0
        %396 = vadd.xlane.f32.xlu0 %v395
        %v397 = vpop.xlane.xlu0 %396
        %v398 = vmul.f32 %v397, %v391
        %v399 = vadd.f32 %v398, 1e-12
        %v400 = vrsqrt.pop %v399
        %v401 = vmul.f32 %v393, %v400
        %v402 = vld [vmem:[%s4] sm:$0x1]
        %v404 = vlaneseq
        %v405 = vshrl.u32 %v404, 7
        %v406 = vsub.s32 0, %v405
        %v407 = vrot.slane %v402, %v406
        %v409 = vmul.f32 %v401, %v407
        %v410 = vld [vmem:[%s5] sm:$0x1]
        %v412 = vlaneseq
        %v413 = vshrl.u32 %v412, 7
        %v414 = vsub.s32 0, %v413
        %v415 = vrot.slane %v410, %v414
        %v417 = vadd.f32 %v409, %v415
        %418 = vst.msk [vmem:[%s315] sm:$0xff] %vm342, %v417
        %s419 = sand.u32 %s168, 1
        %s420 = scalar_lea.sflag [#allocation4], %s419
        %s421 = sand.u32 %s168, 1
        %s422 = smul.addr %s421, 8
        %s423 = scalar_lea.vmem [#allocation8], %s422
        // Predicated region
        $region57: #{tpu_custom_call.1} parent=43 // pred_check
          %p424 = pneg %p178
        $region58: #{tpu_custom_call.1} parent=43 // pred_check_branch
          %426 = sbr.rel (%p424) target = $region60
        $region59: #{tpu_custom_call.1} parent=43 // pred_region
          %s428 = ssub.s32 128, 128
          %429 = vsyncadd %s420, %s428
          %s430 = smul.addr %s24, 128
          %s431 = scalar_lea.hbm %s6, %s430
          %s433 = sshll.u32 %s423, 4
          %s434 = int_to_ptr.vmem [resolvable:$true] %s433
          %436 = dma.vmem_to_hbm [thread:$0]  %s434, 128, %s431, %s420
        $region60: #{tpu_custom_call.1} parent=43 // pred_fallthru
          _
      $region44: #{tpu_custom_call.1} parent=5 // pred_fallthru
        _
      %p437 = scmp.le.s32.totalorder 2, %s19
      // Predicated region
      $region61: #{tpu_custom_call.1} parent=5 // pred_check
        %p438 = pneg %p437
      $region62: #{tpu_custom_call.1} parent=5 // pred_check_branch
        %440 = sbr.rel (%p438) target = $region64
      $region63: #{tpu_custom_call.1} parent=5 // pred_region
        %s441 = ssub.s32 %s19, 2
        // Predicated region
        $region65: #{tpu_custom_call.1} parent=63 // pred_check
          %p442 = pneg %p184
        $region66: #{tpu_custom_call.1} parent=63 // pred_check_branch
          %444 = sbr.rel (%p442) target = $region68
        $region67: #{tpu_custom_call.1} parent=63 // pred_region
          %s445 = sand.u32 %s169, 1
          %s446 = scalar_lea.sflag [#allocation4], %s445
          %s447 = sand.u32 %s169, 1
          %s448 = smul.addr %s447, 8
          %s449 = scalar_lea.vmem [#allocation8], %s448
          %450 = dma.done %s446, 128
        $region68: #{tpu_custom_call.1} parent=63 // pred_fallthru
          _
      $region64: #{tpu_custom_call.1} parent=5 // pred_fallthru
        _
    $region6: #{tpu_custom_call.1} parent=1 // loop_footer
      %s23 = sadd.s32 1, %s19
    $region7: #{tpu_custom_call.1} parent=1 // loop_footer_branch
      %18 = sbr.rel target = $region3
    $region8: #{tpu_custom_call.1} parent=1 // loop_exit
      _
    %451 = vsyncpa [#allocation3], 1
    %s452 = scalar_lea.sflag [#allocation3], 1
    %453 = vsyncpa %s452, 1
    %454 = vsyncpa [#allocation6], 1
    %455 = vsyncpa [#allocation4], 1
    %s456 = scalar_lea.sflag [#allocation4], 1
    %457 = vsyncpa %s456, 1

</llo_original>
